<compile_context>
chip_gen: v5e
topology: v5e:2x2
jax: 0.10.0
libtpu: 0.0.40
codegen_flags: <defaults>
</compile_context>

<pallas_src>
import jax
import jax.numpy as jnp
from jax.experimental import pallas as pl
from jax.experimental.pallas import tpu as pltpu


def _round_up(x, m):
    return (x + m - 1) // m * m


def _vmem_capacity_bytes():
    """Trace-time VMEM capacity query with a conservative (v7x) fallback."""
    try:
        info = pltpu.get_tpu_info()
        cap = getattr(info, "vmem_capacity_bytes", None)
        if cap:
            return int(cap)
    except Exception:
        pass
    return 64 << 20  # conservative: v7x per-TC VMEM


# --------------------------------------------------------------------------- #
# Kernels
# --------------------------------------------------------------------------- #
def ffn_kernel_scratch(x_ref, w1_ref, b1_ref, w2_ref, b2_ref, o_ref, acc_ref):
    """Generic path: f32 accumulator scratch, cast to o_ref dtype at the end."""
    j = pl.program_id(1)

    @pl.when(j == 0)
    def _init():
        acc_ref[...] = jnp.zeros_like(acc_ref)

    # hidden chunk: relu(x @ W1[:, chunk] + b1[chunk]); f32 accumulate on MXU.
    h = jnp.dot(x_ref[...], w1_ref[...], preferred_element_type=jnp.float32)
    h = jnp.maximum(h + b1_ref[...].astype(jnp.float32), 0.0)

    # dropout (eval/inference mode) == identity
    acc_ref[...] += jnp.dot(h.astype(w2_ref.dtype), w2_ref[...],
                            preferred_element_type=jnp.float32)

    @pl.when(j == pl.num_programs(1) - 1)
    def _finalize():
        o_ref[...] = (acc_ref[...] + b2_ref[...].astype(jnp.float32)).astype(o_ref.dtype)


def ffn_kernel_f32out(x_ref, w1_ref, b1_ref, w2_ref, b2_ref, o_ref):
    """f32-output path: accumulate directly in the resident output tile
    (saves tile_m*d_model*4 bytes of VMEM scratch and a final copy)."""
    j = pl.program_id(1)

    @pl.when(j == 0)
    def _init():
        o_ref[...] = jnp.zeros_like(o_ref)

    h = jnp.dot(x_ref[...], w1_ref[...], preferred_element_type=jnp.float32)
    h = jnp.maximum(h + b1_ref[...].astype(jnp.float32), 0.0)

    # dropout (eval/inference mode) == identity
    o_ref[...] += jnp.dot(h.astype(w2_ref.dtype), w2_ref[...],
                          preferred_element_type=jnp.float32)

    @pl.when(j == pl.num_programs(1) - 1)
    def _finalize():
        o_ref[...] += b2_ref[...].astype(jnp.float32)


# --------------------------------------------------------------------------- #
# Wrapper
# --------------------------------------------------------------------------- #
def positionwise_feed_forward(x, w1, b1, w2, b2, *, tile_m=None, tile_f=None,
                              matmul_dtype=jnp.bfloat16):
    """x: [batch, seq, d_model] -> [batch, seq, d_model].

    matmul_dtype: dtype for MXU operands (default bf16; pass jnp.float32 for
                  full-precision matmuls, None to keep x's dtype).
    tile_m/tile_f: optional manual overrides; by default sized from the VMEM
                  budget and the weights-resident check.
    """
    batch, seq, d_model = x.shape
    d_ff = w1.shape[1]
    M = batch * seq
    out_dtype = x.dtype
    out_isz = jnp.dtype(out_dtype).itemsize

    x2d = x.reshape(M, d_model)
    if matmul_dtype is not None:
        x2d = x2d.astype(matmul_dtype)
        w1 = w1.astype(matmul_dtype)
        w2 = w2.astype(matmul_dtype)
    mm_isz = jnp.dtype(x2d.dtype).itemsize

    # Row alignment so sub-32-bit tiles are fully packed in vregs.
    align_m = {1: 32, 2: 16}.get(mm_isz, 8)

    use_scratch = jnp.dtype(out_dtype) != jnp.dtype(jnp.float32)

    # ---- VMEM budget (per-generation) ------------------------------------
    vmem_capacity = _vmem_capacity_bytes()
    vmem_budget = (vmem_capacity * 3) // 4          # ~96 MiB v5e/v6e, ~48 MiB v7x

    def footprint(tm, tf):
        """Approx VMEM bytes: double-buffered operands + acc + hidden chunk."""
        return (2 * tm * d_model * mm_isz           # x tile
                + 2 * tm * d_model * out_isz        # out tile
                + 2 * d_model * tf * mm_isz         # w1 chunk
                + 2 * tf * d_model * mm_isz         # w2 chunk
                + 2 * tf * 4 + 2 * d_model * 4      # biases
                + (tm * d_model * 4 if use_scratch else 0)
                + tm * tf * 4)                      # f32 hidden intermediate

    # ---- d_ff tiling: weights-resident fast path vs. streamed chunks ------
    if tile_f is not None:
        resident = int(tile_f) >= d_ff
    else:
        resident = footprint(256, d_ff) <= int(vmem_budget * 0.9)

    if resident:
        tile_f_eff = d_ff
        d_ff_pad = d_ff
    else:
        tile_f_eff = int(tile_f) if tile_f is not None else 512
        tile_f_eff = max(256, _round_up(tile_f_eff, 256))
        tile_f_eff = min(tile_f_eff, _round_up(d_ff, 256))
        d_ff_pad = _round_up(d_ff, tile_f_eff)

    # ---- token (M) tiling --------------------------------------------------
    if tile_m is not None:
        tm_candidates = [int(tile_m)]
    elif resident:
        tm_candidates = [256]
    else:
        # streaming weights: bigger token tile amortizes the re-streamed
        # weight DMA (v6e/v7x rooflines); fall back to 256 if VMEM is tight.
        tm_candidates = [512, 256]

    tile_m_eff = align_m
    for tm in tm_candidates:
        tm = _round_up(max(align_m, min(tm, _round_up(M, align_m))), align_m)
        tile_m_eff = tm
        if footprint(tm, tile_f_eff) <= vmem_budget:
            break

    M_pad = _round_up(M, tile_m_eff)
    grid_m = M_pad // tile_m_eff
    # Keep >= 2 token tiles when possible so the parallel axis shards across
    # both v7x TensorCores (also harmless on single-TC chips).
    if tile_m is None and grid_m == 1 and M > align_m:
        half = _round_up(-(-M // 2), align_m)
        if half < tile_m_eff:
            tile_m_eff = half
            M_pad = _round_up(M, tile_m_eff)
            grid_m = M_pad // tile_m_eff

    if M_pad != M:
        x2d = jnp.pad(x2d, ((0, M_pad - M), (0, 0)))

    if d_ff_pad != d_ff:
        pad_f = d_ff_pad - d_ff
        w1 = jnp.pad(w1, ((0, 0), (0, pad_f)))
        b1 = jnp.pad(b1, ((0, pad_f),))
        w2 = jnp.pad(w2, ((0, pad_f), (0, 0)))

    b1_2d = b1.reshape(1, d_ff_pad)
    b2_2d = b2.reshape(1, d_model)

    grid_f = d_ff_pad // tile_f_eff
    grid = (grid_m, grid_f)

    # ---- VMEM limit + cost estimate ---------------------------------------
    fp = footprint(tile_m_eff, tile_f_eff)
    vmem_limit = min(max(int(fp * 1.25) + (4 << 20), 32 << 20), vmem_budget)

    b_isz = jnp.dtype(b1_2d.dtype).itemsize
    weight_read_mult = 1 if resident else grid_m
    cost = pl.CostEstimate(
        flops=4 * M_pad * d_model * d_ff_pad,       # two matmuls
        transcendentals=0,
        bytes_accessed=(M_pad * d_model * (mm_isz + out_isz)
                        + weight_read_mult * (w1.size + w2.size) * mm_isz
                        + b1_2d.size * b_isz + b2_2d.size * b_isz),
    )

    if use_scratch:
        kernel = ffn_kernel_scratch
        scratch_shapes = [pltpu.VMEM((tile_m_eff, d_model), jnp.float32)]
    else:
        kernel = ffn_kernel_f32out
        scratch_shapes = []

    # NOTE: if profiling shows exposed weight DMA on the streaming path, add
    # pipeline_mode=pl.Buffered(3) to the w1/w2 BlockSpecs (VMEM permitting).
    out2d = pl.pallas_call(
        kernel,
        out_shape=jax.ShapeDtypeStruct((M_pad, d_model), out_dtype),
        grid_spec=pltpu.PrefetchScalarGridSpec(
            num_scalar_prefetch=0,
            grid=grid,
            in_specs=[
                pl.BlockSpec((tile_m_eff, d_model), lambda i, j: (i, 0)),  # x tile
                pl.BlockSpec((d_model, tile_f_eff), lambda i, j: (0, j)),  # w1 chunk
                pl.BlockSpec((1, tile_f_eff), lambda i, j: (0, j)),        # b1 chunk
                pl.BlockSpec((tile_f_eff, d_model), lambda i, j: (j, 0)),  # w2 chunk
                pl.BlockSpec((1, d_model), lambda i, j: (0, 0)),           # b2
            ],
            out_specs=pl.BlockSpec((tile_m_eff, d_model), lambda i, j: (i, 0)),
            scratch_shapes=scratch_shapes,
        ),
        compiler_params=pltpu.CompilerParams(
            dimension_semantics=("parallel", "arbitrary"),
            vmem_limit_bytes=vmem_limit,
        ),
        cost_estimate=cost,
    )(x2d, w1, b1_2d, w2, b2_2d)

    if M_pad != M:
        out2d = out2d[:M]
    return out2d.reshape(batch, seq, d_model)


def init_params(key, d_model, d_ff, dtype=jnp.float32):
    """Deterministic init mimicking nn.Linear's U(-1/sqrt(fan_in), 1/sqrt(fan_in))."""
    k1, k2, k3, k4 = jax.random.split(key, 4)
    bound1 = 1.0 / (d_model ** 0.5)
    bound2 = 1.0 / (d_ff ** 0.5)
    # stored as [in, out] so the kernel computes x @ W  (PyTorch stores [out, in])
    w1 = jax.random.uniform(k1, (d_model, d_ff), dtype, -bound1, bound1)
    b1 = jax.random.uniform(k2, (d_ff,), dtype, -bound1, bound1)
    w2 = jax.random.uniform(k3, (d_ff, d_model), dtype, -bound2, bound2)
    b2 = jax.random.uniform(k4, (d_model,), dtype, -bound2, bound2)
    return w1, b1, w2, b2


if __name__ == "__main__":
    key = jax.random.PRNGKey(0)
    # Small but lane-dense shapes; seq=60 -> M=120 exercises token padding and
    # the >=2-token-tile (megacore) split.
    batch, seq, d_model, d_ff = 2, 60, 128, 512

    kx, kp = jax.random.split(key)
    x = jax.random.normal(kx, (batch, seq, d_model), jnp.float32)
    w1, b1, w2, b2 = init_params(kp, d_model, d_ff)

    # reference in plain JAX (eval-mode dropout == identity)
    ref = jnp.maximum(x @ w1 + b1, 0.0) @ w2 + b2

    # 1) default: bf16 MXU operands, f32 accumulate, weights-resident fast path
    y = jax.block_until_ready(positionwise_feed_forward(x, w1, b1, w2, b2))
    assert y.shape == (batch, seq, d_model)
    assert jnp.allclose(y, ref, atol=3e-2, rtol=3e-2), "bf16 path mismatch"

    # 2) full-f32 MXU path: tight numerics check
    y32 = jax.block_until_ready(
        positionwise_feed_forward(x, w1, b1, w2, b2, matmul_dtype=jnp.float32))
    assert jnp.allclose(y32, ref, atol=1e-4, rtol=1e-4), "f32 path mismatch"

    # 3) forced weight-streaming path (grid_f > 1), f32, explicit tiles
    y_stream = jax.block_until_ready(
        positionwise_feed_forward(x, w1, b1, w2, b2, tile_m=64, tile_f=256,
                                  matmul_dtype=jnp.float32))
    assert jnp.allclose(y_stream, ref, atol=1e-4, rtol=1e-4), "stream path mismatch"

    # 4) bf16 activations/output: exercises the scratch-accumulator kernel
    y_bf16 = jax.block_until_ready(
        positionwise_feed_forward(x.astype(jnp.bfloat16), w1, b1, w2, b2))
    assert y_bf16.dtype == jnp.bfloat16
    assert jnp.allclose(y_bf16.astype(jnp.float32), ref, atol=6e-2, rtol=6e-2), \
        "bf16-out path mismatch"

    print("KERNEL_OK")
</pallas_src>

<mosaic_0001>
module attributes {stable_mosaic.version = 11 : i64} {
  func.func @ffn_kernel_f32out(%arg0: i32, %arg1: i32, %arg2: memref<64x128xbf16, #tpu.memory_space<vmem>>, %arg3: memref<128x512xbf16, #tpu.memory_space<vmem>>, %arg4: memref<1x512xf32, #tpu.memory_space<vmem>>, %arg5: memref<512x128xbf16, #tpu.memory_space<vmem>>, %arg6: memref<1x128xf32, #tpu.memory_space<vmem>>, %arg7: memref<64x128xf32, #tpu.memory_space<vmem>>) attributes {dimension_semantics = [#tpu.dimension_semantics<parallel>, #tpu.dimension_semantics<arbitrary>], iteration_bounds = array<i64: 2, 1>, scalar_prefetch = 0 : i64, scratch_operands = 0 : i64, tpu.core_type = #tpu.core_type<tc>, window_params = [{transform_indices = @transform_0, window_bounds = array<i64: 64, 128>}, {transform_indices = @transform_1, window_bounds = array<i64: 128, 512>}, {transform_indices = @transform_2, window_bounds = array<i64: 1, 512>}, {transform_indices = @transform_3, window_bounds = array<i64: 512, 128>}, {pipeline_mode = #tpu.pipeline_mode<synchronous>, transform_indices = @transform_4, window_bounds = array<i64: 1, 128>}, {transform_indices = @transform_5, window_bounds = array<i64: 64, 128>}]} {
    %c0_i32 = arith.constant 0 : i32
    %0 = arith.cmpi eq, %arg1, %c0_i32 : i32
    %1 = arith.extui %0 : i1 to i32
    %c0_i32_0 = arith.constant 0 : i32
    %2 = arith.cmpi ne, %1, %c0_i32_0 : i32
    scf.if %2 {
      %cst_16 = arith.constant 0.000000e+00 : f32
      %20 = vector.broadcast %cst_16 : f32 to vector<64x128xf32>
      %c0_17 = arith.constant 0 : index
      %c0_18 = arith.constant 0 : index
      %21 = vector.load %arg7[%c0_17, %c0_18] : memref<64x128xf32, #tpu.memory_space<vmem>>, vector<64x128xf32>
      tpu.vector_store %arg7[%c0_17, %c0_18], %20 {strides = array<i32>} : memref<64x128xf32, #tpu.memory_space<vmem>>, vector<64x128xf32>,
    } else {
    }
    %c0 = arith.constant 0 : index
    %c0_1 = arith.constant 0 : index
    %3 = vector.load %arg2[%c0, %c0_1] : memref<64x128xbf16, #tpu.memory_space<vmem>>, vector<64x128xbf16>
    %c0_2 = arith.constant 0 : index
    %c0_3 = arith.constant 0 : index
    %4 = vector.load %arg3[%c0_2, %c0_3] : memref<128x512xbf16, #tpu.memory_space<vmem>>, vector<128x512xbf16>
    %cst = arith.constant dense<0.000000e+00> : vector<64x512xf32>
    %5 = tpu.matmul %3, %4, %cst {dimension_numbers = #tpu.dot_dimension_numbers<[1], [0], [0], [1], [0, 0, 1, 1], [], []>} : vector<64x128xbf16>, vector<128x512xbf16>, vector<64x512xf32> -> vector<64x512xf32>
    %c0_4 = arith.constant 0 : index
    %c0_5 = arith.constant 0 : index
    %6 = vector.load %arg4[%c0_4, %c0_5] : memref<1x512xf32, #tpu.memory_space<vmem>>, vector<1x512xf32>
    %7 = vector.broadcast %6 : vector<1x512xf32> to vector<64x512xf32>
    %8 = arith.addf %5, %7 : vector<64x512xf32>
    %cst_6 = arith.constant 0.000000e+00 : f32
    %9 = vector.broadcast %cst_6 : f32 to vector<64x512xf32>
    %10 = arith.maximumf %8, %9 : vector<64x512xf32>
    %c0_7 = arith.constant 0 : index
    %c0_8 = arith.constant 0 : index
    %11 = vector.load %arg7[%c0_7, %c0_8] : memref<64x128xf32, #tpu.memory_space<vmem>>, vector<64x128xf32>
    %12 = arith.truncf %10 : vector<64x512xf32> to vector<64x512xbf16>
    %c0_9 = arith.constant 0 : index
    %c0_10 = arith.constant 0 : index
    %13 = vector.load %arg5[%c0_9, %c0_10] : memref<512x128xbf16, #tpu.memory_space<vmem>>, vector<512x128xbf16>
    %cst_11 = arith.constant dense<0.000000e+00> : vector<64x128xf32>
    %14 = tpu.matmul %12, %13, %cst_11 {dimension_numbers = #tpu.dot_dimension_numbers<[1], [0], [0], [1], [0, 0, 1, 1], [], []>} : vector<64x512xbf16>, vector<512x128xbf16>, vector<64x128xf32> -> vector<64x128xf32>
    %15 = arith.addf %11, %14 : vector<64x128xf32>
    %c0_12 = arith.constant 0 : index
    %c0_13 = arith.constant 0 : index
    %16 = vector.load %arg7[%c0_12, %c0_13] : memref<64x128xf32, #tpu.memory_space<vmem>>, vector<64x128xf32>
    tpu.vector_store %arg7[%c0_12, %c0_13], %15 {strides = array<i32>} : memref<64x128xf32, #tpu.memory_space<vmem>>, vector<64x128xf32>,
    %c0_i32_14 = arith.constant 0 : i32
    %17 = arith.cmpi eq, %arg1, %c0_i32_14 : i32
    %18 = arith.extui %17 : i1 to i32
    %c0_i32_15 = arith.constant 0 : i32
    %19 = arith.cmpi ne, %18, %c0_i32_15 : i32
    scf.if %19 {
      %c0_16 = arith.constant 0 : index
      %c0_17 = arith.constant 0 : index
      %20 = vector.load %arg7[%c0_16, %c0_17] : memref<64x128xf32, #tpu.memory_space<vmem>>, vector<64x128xf32>
      %c0_18 = arith.constant 0 : index
      %c0_19 = arith.constant 0 : index
      %21 = vector.load %arg6[%c0_18, %c0_19] : memref<1x128xf32, #tpu.memory_space<vmem>>, vector<1x128xf32>
      %22 = vector.broadcast %21 : vector<1x128xf32> to vector<64x128xf32>
      %23 = arith.addf %20, %22 : vector<64x128xf32>
      %c0_20 = arith.constant 0 : index
      %c0_21 = arith.constant 0 : index
      %24 = vector.load %arg7[%c0_20, %c0_21] : memref<64x128xf32, #tpu.memory_space<vmem>>, vector<64x128xf32>
      tpu.vector_store %arg7[%c0_20, %c0_21], %23 {strides = array<i32>} : memref<64x128xf32, #tpu.memory_space<vmem>>, vector<64x128xf32>,
    } else {
    }
    return
  }
  func.func @transform_0(%arg0: i32, %arg1: i32) -> (i32, i32) {
    %c0_i32 = arith.constant 0 : i32
    %c0_i32_0 = arith.constant 0 : i32
    return %arg0, %c0_i32 : i32, i32
  }
  func.func @transform_1(%arg0: i32, %arg1: i32) -> (i32, i32) {
    %c0_i32 = arith.constant 0 : i32
    %c0_i32_0 = arith.constant 0 : i32
    return %c0_i32, %arg1 : i32, i32
  }
  func.func @transform_2(%arg0: i32, %arg1: i32) -> (i32, i32) {
    %c0_i32 = arith.constant 0 : i32
    %c0_i32_0 = arith.constant 0 : i32
    return %c0_i32, %arg1 : i32, i32
  }
  func.func @transform_3(%arg0: i32, %arg1: i32) -> (i32, i32) {
    %c0_i32 = arith.constant 0 : i32
    %c0_i32_0 = arith.constant 0 : i32
    return %arg1, %c0_i32 : i32, i32
  }
  func.func @transform_4(%arg0: i32, %arg1: i32) -> (i32, i32) {
    %c0_i32 = arith.constant 0 : i32
    %c0_i32_0 = arith.constant 0 : i32
    %c0_i32_1 = arith.constant 0 : i32
    return %c0_i32, %c0_i32_0 : i32, i32
  }
  func.func @transform_5(%arg0: i32, %arg1: i32) -> (i32, i32) {
    %c0_i32 = arith.constant 0 : i32
    %c0_i32_0 = arith.constant 0 : i32
    return %arg0, %c0_i32 : i32, i32
  }
}

</mosaic_0001>

<llo_original>
// kernel: tpu_custom_call.1
$region0: #{tpu_custom_call.1}
  #allocation0 [shape = 'u32[]', space=smem, size = 0x4, offset = 0x4, fixed_abs, tag = 'smem constant byte address 0x4 - core index']
  #allocation1 [shape = 'u32[72,128]{1,0:T(1,128)}', space=vmem, size = 0x9000, scoped, tag = 'internal scratch']
  %s0 = inlined_call_operand.hbm [shape: bf16[128,128], index: 0, kind: input, shape index: {}]
  %s1 = inlined_call_operand.hbm [shape: bf16[128,512], index: 1, kind: input, shape index: {}]
  %s2 = inlined_call_operand.hbm [shape: f32[1,512], index: 2, kind: input, shape index: {}]
  %s3 = inlined_call_operand.hbm [shape: bf16[512,128], index: 3, kind: input, shape index: {}]
  %s4 = inlined_call_operand.vmem [shape: f32[1,128], index: 4, kind: input, shape index: {}]
  %s5 = inlined_call_operand.hbm [shape: f32[128,128], index: 5, kind: output, shape index: {}]
  %s6 = sld [smem:[#allocation0]]
  $region77: #{tpu_custom_call.1} parent=0
    _
  %s8 = ssub.s32 1, %s6
  %s9 = scalar_select 0, %s8, %s6
  $region1: #{tpu_custom_call.1} parent=0
    #allocation2 [shape = 'u8[32768]{0}', space=vmem, size = 0x8000, scoped, tag = 'input window, operand 0']
    #allocation3 [shape = 's32[2]{0}', space=sflag, size = 0x8, scoped, tag = 'scoped memory for tpu_custom_call.1']
    #allocation4 [shape = 's32[2]{0}', space=sflag, size = 0x8, scoped, tag = 'scoped memory for tpu_custom_call.1']
    #allocation5 [shape = 'u8[131072]{0}', space=vmem, size = 0x20000, scoped, tag = 'input window, operand 1, single buffered']
    #allocation6 [shape = 's32[1]{0}', space=sflag, size = 0x4, scoped, tag = 'scoped memory for tpu_custom_call.1']
    #allocation7 [shape = 'u8[2048]{0}', space=vmem, size = 0x800, scoped, tag = 'input window, operand 2, single buffered']
    #allocation8 [shape = 'u8[131072]{0}', space=vmem, size = 0x20000, scoped, tag = 'input window, operand 3, single buffered']
    #allocation9 [shape = 's32[1]{0}', space=sflag, size = 0x4, scoped, tag = 'scoped memory for tpu_custom_call.1']
    #allocation10 [shape = 'u8[65536]{0}', space=vmem, size = 0x10000, scoped, tag = 'output window, operand 0']
    %10 = vsyncpa [#allocation3], 0
    %s11 = scalar_lea.sflag [#allocation3], 1
    %12 = vsyncpa %s11, 0
    %13 = vsyncpa [#allocation6], 0
    %14 = vsyncpa [#allocation9], 0
    %15 = vsyncpa [#allocation4], 0
    %s16 = scalar_lea.sflag [#allocation4], 1
    %17 = vsyncpa %s16, 0
    loop: start=0, step=1, limit=4
    $region2: #{tpu_custom_call.1} parent=1 // loop_pre_header
      _
    $region3: #{tpu_custom_call.1} parent=1 // loop_header
      %s19 = sphi 0, %s23
      %p20 = scmp.ge.s32.totalorder %s19, 4
      %s26 = sphi 0, %s38
      %s27 = sphi 0, %s34
      %s28 = sphi 0, %s26
      %s29 = sphi 0, %s27
      %s30 = sphi 0, %s28
      %s31 = sphi 0, %s29
      %s41 = sphi 0, %s43
      %s44 = sphi 0, %s41
      %s45 = sphi 0, %s44
      %s61 = sphi 0, %s45
      %s67 = sphi 0, %s69
      %s70 = sphi 0, %s67
      %s71 = sphi 0, %s70
      %s87 = sphi 0, %s71
      %s93 = sphi 0, %s95
      %s96 = sphi 0, %s93
      %s97 = sphi 0, %s96
      %s113 = sphi 0, %s97
      %s119 = sphi 0, %s121
      %s122 = sphi 0, %s119
      %s123 = sphi 0, %s122
      %s139 = sphi 0, %s123
      %s143 = sphi 0, %s143
      %s145 = sphi 0, %s143
      %s146 = sphi 0, %s145
      %s160 = sphi 0, %s146
      %s166 = sphi 0, %s168
      %s169 = sphi 0, %s166
      %s170 = sphi 0, %s169
      %s186 = sphi 0, %s170
    $region4: #{tpu_custom_call.1} parent=1 // loop_header_branch
      %22 = sbr.rel (%p20) target = $region8
    $region5: #{tpu_custom_call.1} parent=1 // loop_body
      %s24 = ssub.s32 %s19, 1
      %s25 = ssub.s32 %s19, 2
      %s32 = sadd.s32 1, %s27
      %p33 = scmp.ge.s32.totalorder %s32, 1
      %s34 = scalar_select %p33, 0, %s32
      %s35 = sadd.s32 1, %s26
      %s36 = scalar_select %p33, %s35, %s26
      %p37 = scmp.ge.s32.totalorder %s36, 2
      %s38 = scalar_select %p37, 0, %s36
      %s39 = ssub.s32 %s26, %s38
      %p40 = scmp.eq.s32.totalorder %s39, 0
      %s42 = sadd.s32 %s41, 1
      %s43 = scalar_select %p40, %s41, %s42
      %p46 = pneg %p40
      %p47 = scmp.eq.s32.totalorder %s19, 1
      %p48 = por %p46, %p47
      %p49 = scmp.ne.s32.totalorder %s41, %s44
      %p50 = scmp.eq.s32.totalorder %s19, 0
      %p51 = por %p49, %p50
      %p52 = scmp.ne.s32.totalorder %s41, %s44
      %p53 = scmp.eq.s32.totalorder %s24, 1
      %p54 = por %p52, %p53
      %p55 = scmp.ne.s32.totalorder %s44, %s45
      %p56 = scmp.eq.s32.totalorder %s24, 0
      %p57 = por %p55, %p56
      %p58 = scmp.ne.s32.totalorder %s44, %s45
      %p59 = scmp.eq.s32.totalorder %s25, 1
      %p60 = por %p58, %p59
      %p62 = scmp.ne.s32.totalorder %s45, %s61
      %p63 = scmp.eq.s32.totalorder %s25, 0
      %p64 = por %p62, %p63
      %s65 = ssub.s32 %s27, %s34
      %p66 = scmp.eq.s32.totalorder %s65, 0
      %s68 = sadd.s32 %s67, 1
      %s69 = scalar_select %p66, %s67, %s68
      %p72 = pneg %p66
      %p73 = scmp.eq.s32.totalorder %s19, 1
      %p74 = por %p72, %p73
      %p75 = scmp.ne.s32.totalorder %s67, %s70
      %p76 = scmp.eq.s32.totalorder %s19, 0
      %p77 = por %p75, %p76
      %p78 = scmp.ne.s32.totalorder %s67, %s70
      %p79 = scmp.eq.s32.totalorder %s24, 1
      %p80 = por %p78, %p79
      %p81 = scmp.ne.s32.totalorder %s70, %s71
      %p82 = scmp.eq.s32.totalorder %s24, 0
      %p83 = por %p81, %p82
      %p84 = scmp.ne.s32.totalorder %s70, %s71
      %p85 = scmp.eq.s32.totalorder %s25, 1
      %p86 = por %p84, %p85
      %p88 = scmp.ne.s32.totalorder %s71, %s87
      %p89 = scmp.eq.s32.totalorder %s25, 0
      %p90 = por %p88, %p89
      %s91 = ssub.s32 %s27, %s34
      %p92 = scmp.eq.s32.totalorder %s91, 0
      %s94 = sadd.s32 %s93, 1
      %s95 = scalar_select %p92, %s93, %s94
      %p98 = pneg %p92
      %p99 = scmp.eq.s32.totalorder %s19, 1
      %p100 = por %p98, %p99
      %p101 = scmp.ne.s32.totalorder %s93, %s96
      %p102 = scmp.eq.s32.totalorder %s19, 0
      %p103 = por %p101, %p102
      %p104 = scmp.ne.s32.totalorder %s93, %s96
      %p105 = scmp.eq.s32.totalorder %s24, 1
      %p106 = por %p104, %p105
      %p107 = scmp.ne.s32.totalorder %s96, %s97
      %p108 = scmp.eq.s32.totalorder %s24, 0
      %p109 = por %p107, %p108
      %p110 = scmp.ne.s32.totalorder %s96, %s97
      %p111 = scmp.eq.s32.totalorder %s25, 1
      %p112 = por %p110, %p111
      %p114 = scmp.ne.s32.totalorder %s97, %s113
      %p115 = scmp.eq.s32.totalorder %s25, 0
      %p116 = por %p114, %p115
      %s117 = ssub.s32 %s27, %s34
      %p118 = scmp.eq.s32.totalorder %s117, 0
      %s120 = sadd.s32 %s119, 1
      %s121 = scalar_select %p118, %s119, %s120
      %p124 = pneg %p118
      %p125 = scmp.eq.s32.totalorder %s19, 1
      %p126 = por %p124, %p125
      %p127 = scmp.ne.s32.totalorder %s119, %s122
      %p128 = scmp.eq.s32.totalorder %s19, 0
      %p129 = por %p127, %p128
      %p130 = scmp.ne.s32.totalorder %s119, %s122
      %p131 = scmp.eq.s32.totalorder %s24, 1
      %p132 = por %p130, %p131
      %p133 = scmp.ne.s32.totalorder %s122, %s123
      %p134 = scmp.eq.s32.totalorder %s24, 0
      %p135 = por %p133, %p134
      %p136 = scmp.ne.s32.totalorder %s122, %s123
      %p137 = scmp.eq.s32.totalorder %s25, 1
      %p138 = por %p136, %p137
      %p140 = scmp.ne.s32.totalorder %s123, %s139
      %p141 = scmp.eq.s32.totalorder %s25, 0
      %p142 = por %p140, %p141
      %s144 = sadd.s32 %s143, 1
      %p147 = scmp.eq.s32.totalorder %s19, 1
      %p148 = scmp.ne.s32.totalorder %s143, %s145
      %p149 = scmp.eq.s32.totalorder %s19, 0
      %p150 = por %p148, %p149
      %p151 = scmp.ne.s32.totalorder %s143, %s145
      %p152 = scmp.eq.s32.totalorder %s24, 1
      %p153 = por %p151, %p152
      %p154 = scmp.ne.s32.totalorder %s145, %s146
      %p155 = scmp.eq.s32.totalorder %s24, 0
      %p156 = por %p154, %p155
      %p157 = scmp.ne.s32.totalorder %s145, %s146
      %p158 = scmp.eq.s32.totalorder %s25, 1
      %p159 = por %p157, %p158
      %p161 = scmp.ne.s32.totalorder %s146, %s160
      %p162 = scmp.eq.s32.totalorder %s25, 0
      %p163 = por %p161, %p162
      %s164 = ssub.s32 %s26, %s38
      %p165 = scmp.eq.s32.totalorder %s164, 0
      %s167 = sadd.s32 %s166, 1
      %s168 = scalar_select %p165, %s166, %s167
      %p171 = pneg %p165
      %p172 = scmp.eq.s32.totalorder %s19, 1
      %p173 = por %p171, %p172
      %p174 = scmp.ne.s32.totalorder %s166, %s169
      %p175 = scmp.eq.s32.totalorder %s19, 0
      %p176 = por %p174, %p175
      %p177 = scmp.ne.s32.totalorder %s166, %s169
      %p178 = scmp.eq.s32.totalorder %s24, 1
      %p179 = por %p177, %p178
      %p180 = scmp.ne.s32.totalorder %s169, %s170
      %p181 = scmp.eq.s32.totalorder %s24, 0
      %p182 = por %p180, %p181
      %p183 = scmp.ne.s32.totalorder %s169, %s170
      %p184 = scmp.eq.s32.totalorder %s25, 1
      %p185 = por %p183, %p184
      %p187 = scmp.ne.s32.totalorder %s170, %s186
      %p188 = scmp.eq.s32.totalorder %s25, 0
      %p189 = por %p187, %p188
      %p190 = scmp.le.s32.totalorder 1, %s19
      %p191 = scmp.lt.s32.totalorder %s19, 3
      %p192 = pnand %p190, %p191
      %p193 = pneg %p192
      // Predicated region
      $region9: #{tpu_custom_call.1} parent=5 // pred_check
        _
      $region10: #{tpu_custom_call.1} parent=5 // pred_check_branch
        %195 = sbr.rel (%p192) target = $region12
      $region11: #{tpu_custom_call.1} parent=5 // pred_region
        %s196 = ssub.s32 %s19, 1
        // Predicated region
        $region13: #{tpu_custom_call.1} parent=11 // pred_check
          %p197 = pneg %p83
        $region14: #{tpu_custom_call.1} parent=11 // pred_check_branch
          %199 = sbr.rel (%p197) target = $region16
        $region15: #{tpu_custom_call.1} parent=11 // pred_region
          %s200 = smul.u32 4, %s29
          %202 = vsyncadd [#allocation6], 0
          %s203 = smul.addr %s200, 4
          %s204 = scalar_lea.hbm %s1, %s203
          %s205 = sshll.u32 %s204, 4
          %s206 = int_to_ptr.hbm [resolvable:$true] %s205
          %s207 = sshll.u32 [#allocation5], 4
          %s208 = int_to_ptr.vmem [resolvable:$true] %s207
          %213 = dma.hbm_to_vmem [thread:$0]  %s206, 4096, %s208, [#allocation6], 256, 256, 16
        $region16: #{tpu_custom_call.1} parent=11 // pred_fallthru
          _
        // Predicated region
        $region17: #{tpu_custom_call.1} parent=11 // pred_check
          %p214 = pneg %p109
        $region18: #{tpu_custom_call.1} parent=11 // pred_check_branch
          %216 = sbr.rel (%p214) target = $region20
        $region19: #{tpu_custom_call.1} parent=11 // pred_region
          %s217 = smul.u32 4, %s29
          %219 = vsyncadd [#allocation6], 0
          %s220 = scalar_lea.hbm %s2, %s217
          %s222 = sshll.u32 %s220, 4
          %s223 = int_to_ptr.hbm [resolvable:$true] %s222
          %s224 = sshll.u32 [#allocation7], 4
          %s225 = int_to_ptr.vmem [resolvable:$true] %s224
          %227 = dma.hbm_to_vmem [thread:$0]  %s223, 64, %s225, [#allocation6]
        $region20: #{tpu_custom_call.1} parent=11 // pred_fallthru
          _
        // Predicated region
        $region21: #{tpu_custom_call.1} parent=11 // pred_check
          %p228 = pneg %p135
        $region22: #{tpu_custom_call.1} parent=11 // pred_check_branch
          %230 = sbr.rel (%p228) target = $region24
        $region23: #{tpu_custom_call.1} parent=11 // pred_region
          %s231 = smul.u32 64, %s29
          %233 = vsyncadd [#allocation9], 0
          %s234 = smul.addr %s231, 4
          %s235 = scalar_lea.hbm %s3, %s234
          %s236 = sshll.u32 %s235, 4
          %s237 = int_to_ptr.hbm [resolvable:$true] %s236
          %s238 = sshll.u32 [#allocation8], 4
          %s239 = int_to_ptr.vmem [resolvable:$true] %s238
          %244 = dma.hbm_to_vmem [thread:$0]  %s237, 4096, %s239, [#allocation9], 64, 64, 4
        $region24: #{tpu_custom_call.1} parent=11 // pred_fallthru
          _
        // Predicated region
        $region25: #{tpu_custom_call.1} parent=11 // pred_check
          %p245 = pneg %p156
        $region26: #{tpu_custom_call.1} parent=11 // pred_check_branch
          %247 = sbr.rel (%p245) target = $region28
        $region27: #{tpu_custom_call.1} parent=11 // pred_region
          _
        $region28: #{tpu_custom_call.1} parent=11 // pred_fallthru
          _
      $region12: #{tpu_custom_call.1} parent=5 // pred_fallthru
        _
      %p248 = scmp.lt.s32.totalorder %s19, 2
      // Predicated region
      $region29: #{tpu_custom_call.1} parent=5 // pred_check
        %p249 = pneg %p248
      $region30: #{tpu_custom_call.1} parent=5 // pred_check_branch
        %251 = sbr.rel (%p249) target = $region32
      $region31: #{tpu_custom_call.1} parent=5 // pred_region
        // Predicated region
        $region33: #{tpu_custom_call.1} parent=31 // pred_check
          %p252 = pneg %p51
        $region34: #{tpu_custom_call.1} parent=31 // pred_check_branch
          %254 = sbr.rel (%p252) target = $region36
        $region35: #{tpu_custom_call.1} parent=31 // pred_region
          %s255 = sand.u32 %s41, 1
          %s256 = scalar_lea.sflag [#allocation3], %s255
          %s257 = sand.u32 %s41, 1
          %s258 = smul.addr %s257, 32
          %s259 = scalar_lea.vmem [#allocation2], %s258
          %s260 = smul.u32 8, %s26
          %262 = vsyncadd %s256, 0
          %s263 = smul.addr %s260, 4
          %s264 = scalar_lea.hbm %s0, %s263
          %s265 = sshll.u32 %s264, 4
          %s266 = int_to_ptr.hbm [resolvable:$true] %s265
          %s267 = sshll.u32 %s259, 4
          %s268 = int_to_ptr.vmem [resolvable:$true] %s267
          %273 = dma.hbm_to_vmem [thread:$0]  %s266, 512, %s268, %s256, 64, 64, 4
        $region36: #{tpu_custom_call.1} parent=31 // pred_fallthru
          _
      $region32: #{tpu_custom_call.1} parent=5 // pred_fallthru
        _
      %p274 = scmp.le.s32.totalorder 1, %s19
      %p275 = scmp.lt.s32.totalorder %s19, 3
      %p276 = pnand %p274, %p275
      %p277 = pneg %p276
      // Predicated region
      $region37: #{tpu_custom_call.1} parent=5 // pred_check
        _
      $region38: #{tpu_custom_call.1} parent=5 // pred_check_branch
        %279 = sbr.rel (%p276) target = $region40
      $region39: #{tpu_custom_call.1} parent=5 // pred_region
        %s280 = ssub.s32 %s19, 1
        %s281 = sand.u32 %s44, 1
        %s282 = scalar_lea.sflag [#allocation3], %s281
        %s283 = sand.u32 %s44, 1
        %s284 = smul.addr %s283, 32
        %s285 = scalar_lea.vmem [#allocation2], %s284
        // Predicated region
        $region41: #{tpu_custom_call.1} parent=39 // pred_check
          %p286 = pneg %p57
        $region42: #{tpu_custom_call.1} parent=39 // pred_check_branch
          %288 = sbr.rel (%p286) target = $region44
        $region43: #{tpu_custom_call.1} parent=39 // pred_region
          %290 = dma.done %s282, 512
        $region44: #{tpu_custom_call.1} parent=39 // pred_fallthru
          _
        // Predicated region
        $region45: #{tpu_custom_call.1} parent=39 // pred_check
          %p291 = pneg %p83
        $region46: #{tpu_custom_call.1} parent=39 // pred_check_branch
          %293 = sbr.rel (%p291) target = $region48
        $region47: #{tpu_custom_call.1} parent=39 // pred_region
          %295 = dma.done [#allocation6], 4096
        $region48: #{tpu_custom_call.1} parent=39 // pred_fallthru
          _
        // Predicated region
        $region49: #{tpu_custom_call.1} parent=39 // pred_check
          %p296 = pneg %p109
        $region50: #{tpu_custom_call.1} parent=39 // pred_check_branch
          %298 = sbr.rel (%p296) target = $region52
        $region51: #{tpu_custom_call.1} parent=39 // pred_region
          %300 = dma.done [#allocation6], 64
        $region52: #{tpu_custom_call.1} parent=39 // pred_fallthru
          _
        // Predicated region
        $region53: #{tpu_custom_call.1} parent=39 // pred_check
          %p301 = pneg %p135
        $region54: #{tpu_custom_call.1} parent=39 // pred_check_branch
          %303 = sbr.rel (%p301) target = $region56
        $region55: #{tpu_custom_call.1} parent=39 // pred_region
          %305 = dma.done [#allocation9], 4096
        $region56: #{tpu_custom_call.1} parent=39 // pred_fallthru
          _
        %s306 = sand.u32 %s44, 1
        %s307 = scalar_lea.sflag [#allocation3], %s306
        %s308 = sand.u32 %s44, 1
        %s309 = smul.addr %s308, 32
        %s310 = scalar_lea.vmem [#allocation2], %s309
        %p311 = pneg %p57
        %p312 = pneg %p54
        %p313 = pneg %p83
        %p314 = pneg %p80
        %p315 = pneg %p109
        %p316 = pneg %p106
        %p317 = pneg %p135
        %p318 = pneg %p132
        %p319 = pneg %p156
        %p320 = pneg %p153
        %p321 = pneg %p182
        %p322 = pneg %p179
        %s323 = sand.u32 %s169, 1
        %s324 = scalar_lea.sflag [#allocation4], %s323
        %s325 = sand.u32 %s169, 1
        %s326 = smul.addr %s325, 64
        %s327 = scalar_lea.vmem [#allocation10], %s326
        %s328 = smul.u32 8, %s28
        %s329 = smul.u32 4, %s29
        %s330 = smul.u32 4, %s29
        %s331 = smul.u32 64, %s29
        %s332 = smul.u32 8, %s28
        %p333 = scmp.eq.s32.totalorder %s29, 0
        // Predicated region
        $region57: #{tpu_custom_call.1} parent=39 // pred_check
          %p334 = pneg %p333
        $region58: #{tpu_custom_call.1} parent=39 // pred_check_branch
          %336 = sbr.rel (%p334) target = $region60
        $region59: #{tpu_custom_call.1} parent=39 // pred_region
          %337 = vst [vmem:[%s327] sm:$0xff] 0.0
          %338 = vst [vmem:[%s327 + $0x8] sm:$0xff] 0.0
          %339 = vst [vmem:[%s327 + $0x10] sm:$0xff] 0.0
          %340 = vst [vmem:[%s327 + $0x18] sm:$0xff] 0.0
          %341 = vst [vmem:[%s327 + $0x20] sm:$0xff] 0.0
          %342 = vst [vmem:[%s327 + $0x28] sm:$0xff] 0.0
          %343 = vst [vmem:[%s327 + $0x30] sm:$0xff] 0.0
          %344 = vst [vmem:[%s327 + $0x38] sm:$0xff] 0.0
        $region60: #{tpu_custom_call.1} parent=39 // pred_fallthru
          _
        %v345 = vld [vmem:[%s285] sm:$0xf]
        %v346 = vld [vmem:[%s285 + $0x4] sm:$0xf]
        %v347 = vld [vmem:[%s285 + $0x8] sm:$0xf]
        %v348 = vld [vmem:[%s285 + $0xc] sm:$0xf]
        %v349 = vld [vmem:[%s285 + $0x10] sm:$0xf]
        %v350 = vld [vmem:[%s285 + $0x14] sm:$0xf]
        %v351 = vld [vmem:[%s285 + $0x18] sm:$0xf]
        %v352 = vld [vmem:[%s285 + $0x1c] sm:$0xf]
        %v353 = vld [vmem:[#allocation5] sm:$0xff]
        %v354 = vld [vmem:[#allocation5 + $0x8] sm:$0xff]
        %v355 = vld [vmem:[#allocation5 + $0x10] sm:$0xff]
        %v356 = vld [vmem:[#allocation5 + $0x18] sm:$0xff]
        %v357 = vld [vmem:[#allocation5 + $0x20] sm:$0xff]
        %v358 = vld [vmem:[#allocation5 + $0x28] sm:$0xff]
        %v359 = vld [vmem:[#allocation5 + $0x30] sm:$0xff]
        %v360 = vld [vmem:[#allocation5 + $0x38] sm:$0xff]
        %v361 = vld [vmem:[#allocation5 + $0x40] sm:$0xff]
        %v362 = vld [vmem:[#allocation5 + $0x48] sm:$0xff]
        %v363 = vld [vmem:[#allocation5 + $0x50] sm:$0xff]
        %v364 = vld [vmem:[#allocation5 + $0x58] sm:$0xff]
        %v365 = vld [vmem:[#allocation5 + $0x60] sm:$0xff]
        %v366 = vld [vmem:[#allocation5 + $0x68] sm:$0xff]
        %v367 = vld [vmem:[#allocation5 + $0x70] sm:$0xff]
        %v368 = vld [vmem:[#allocation5 + $0x78] sm:$0xff]
        %v369 = vld [vmem:[#allocation5 + $0x80] sm:$0xff]
        %v370 = vld [vmem:[#allocation5 + $0x88] sm:$0xff]
        %v371 = vld [vmem:[#allocation5 + $0x90] sm:$0xff]
        %v372 = vld [vmem:[#allocation5 + $0x98] sm:$0xff]
        %v373 = vld [vmem:[#allocation5 + $0xa0] sm:$0xff]
        %v374 = vld [vmem:[#allocation5 + $0xa8] sm:$0xff]
        %v375 = vld [vmem:[#allocation5 + $0xb0] sm:$0xff]
        %v376 = vld [vmem:[#allocation5 + $0xb8] sm:$0xff]
        %v377 = vld [vmem:[#allocation5 + $0xc0] sm:$0xff]
        %v378 = vld [vmem:[#allocation5 + $0xc8] sm:$0xff]
        %v379 = vld [vmem:[#allocation5 + $0xd0] sm:$0xff]
        %v380 = vld [vmem:[#allocation5 + $0xd8] sm:$0xff]
        %v381 = vld [vmem:[#allocation5 + $0xe0] sm:$0xff]
        %v382 = vld [vmem:[#allocation5 + $0xe8] sm:$0xff]
        %v383 = vld [vmem:[#allocation5 + $0xf0] sm:$0xff]
        %v384 = vld [vmem:[#allocation5 + $0xf8] sm:$0xff]
        %v385 = vld [vmem:[#allocation7] sm:$0xf]
        %v387 = vperm.slane %v385, 0
        %v388 = vperm.slane %v385, 1
        %v389 = vperm.slane %v385, 2
        %v390 = vperm.slane %v385, 3
        %v403 = vunpack.c.l.b16 %v345
        %v404 = vunpack.c.l.b16 %v346
        %v405 = vunpack.c.l.b16 %v347
        %v406 = vunpack.c.l.b16 %v348
        %v407 = vunpack.c.l.b16 %v349
        %v408 = vunpack.c.l.b16 %v350
        %v409 = vunpack.c.l.b16 %v351
        %v410 = vunpack.c.l.b16 %v352
        %v411 = vpack.c.b16 %v404, %v403
        %v412 = vpack.c.b16 %v406, %v405
        %v413 = vpack.c.b16 %v408, %v407
        %v414 = vpack.c.b16 %v410, %v409
        %v451 = vunpack.c.l.b16 %v353
        %v452 = vunpack.c.h.b16 %v353
        %v453 = vunpack.c.l.b16 %v354
        %v454 = vunpack.c.h.b16 %v354
        %v455 = vunpack.c.l.b16 %v355
        %v456 = vunpack.c.h.b16 %v355
        %v457 = vunpack.c.l.b16 %v356
        %v458 = vunpack.c.h.b16 %v356
        %v459 = vunpack.c.l.b16 %v357
        %v460 = vunpack.c.h.b16 %v357
        %v461 = vunpack.c.l.b16 %v358
        %v462 = vunpack.c.h.b16 %v358
        %v463 = vunpack.c.l.b16 %v359
        %v464 = vunpack.c.h.b16 %v359
        %v465 = vunpack.c.l.b16 %v360
        %v466 = vunpack.c.h.b16 %v360
        %v467 = vunpack.c.l.b16 %v361
        %v468 = vunpack.c.h.b16 %v361
        %v469 = vunpack.c.l.b16 %v362
        %v470 = vunpack.c.h.b16 %v362
        %v471 = vunpack.c.l.b16 %v363
        %v472 = vunpack.c.h.b16 %v363
        %v473 = vunpack.c.l.b16 %v364
        %v474 = vunpack.c.h.b16 %v364
        %v475 = vunpack.c.l.b16 %v365
        %v476 = vunpack.c.h.b16 %v365
        %v477 = vunpack.c.l.b16 %v366
        %v478 = vunpack.c.h.b16 %v366
        %v479 = vunpack.c.l.b16 %v367
        %v480 = vunpack.c.h.b16 %v367
        %v481 = vunpack.c.l.b16 %v368
        %v482 = vunpack.c.h.b16 %v368
        %v483 = vunpack.c.l.b16 %v369
        %v484 = vunpack.c.h.b16 %v369
        %v485 = vunpack.c.l.b16 %v370
        %v486 = vunpack.c.h.b16 %v370
        %v487 = vunpack.c.l.b16 %v371
        %v488 = vunpack.c.h.b16 %v371
        %v489 = vunpack.c.l.b16 %v372
        %v490 = vunpack.c.h.b16 %v372
        %v491 = vunpack.c.l.b16 %v373
        %v492 = vunpack.c.h.b16 %v373
        %v493 = vunpack.c.l.b16 %v374
        %v494 = vunpack.c.h.b16 %v374
        %v495 = vunpack.c.l.b16 %v375
        %v496 = vunpack.c.h.b16 %v375
        %v497 = vunpack.c.l.b16 %v376
        %v498 = vunpack.c.h.b16 %v376
        %v499 = vunpack.c.l.b16 %v377
        %v500 = vunpack.c.h.b16 %v377
        %v501 = vunpack.c.l.b16 %v378
        %v502 = vunpack.c.h.b16 %v378
        %v503 = vunpack.c.l.b16 %v379
        %v504 = vunpack.c.h.b16 %v379
        %v505 = vunpack.c.l.b16 %v380
        %v506 = vunpack.c.h.b16 %v380
        %v507 = vunpack.c.l.b16 %v381
        %v508 = vunpack.c.h.b16 %v381
        %v509 = vunpack.c.l.b16 %v382
        %v510 = vunpack.c.h.b16 %v382
        %v511 = vunpack.c.l.b16 %v383
        %v512 = vunpack.c.h.b16 %v383
        %v513 = vunpack.c.l.b16 %v384
        %v514 = vunpack.c.h.b16 %v384
        %v515 = vpack.c.b16 %v455, %v451
        %v516 = vpack.c.b16 %v456, %v452
        %v517 = vpack.c.b16 %v457, %v453
        %v518 = vpack.c.b16 %v458, %v454
        %v519 = vpack.c.b16 %v463, %v459
        %v520 = vpack.c.b16 %v464, %v460
        %v521 = vpack.c.b16 %v465, %v461
        %v522 = vpack.c.b16 %v466, %v462
        %v523 = vpack.c.b16 %v471, %v467
        %v524 = vpack.c.b16 %v472, %v468
        %v525 = vpack.c.b16 %v473, %v469
        %v526 = vpack.c.b16 %v474, %v470
        %v527 = vpack.c.b16 %v479, %v475
        %v528 = vpack.c.b16 %v480, %v476
        %v529 = vpack.c.b16 %v481, %v477
        %v530 = vpack.c.b16 %v482, %v478
        %v531 = vpack.c.b16 %v487, %v483
        %v532 = vpack.c.b16 %v488, %v484
        %v533 = vpack.c.b16 %v489, %v485
        %v534 = vpack.c.b16 %v490, %v486
        %v535 = vpack.c.b16 %v495, %v491
        %v536 = vpack.c.b16 %v496, %v492
        %v537 = vpack.c.b16 %v497, %v493
        %v538 = vpack.c.b16 %v498, %v494
        %v539 = vpack.c.b16 %v503, %v499
        %v540 = vpack.c.b16 %v504, %v500
        %v541 = vpack.c.b16 %v505, %v501
        %v542 = vpack.c.b16 %v506, %v502
        %v543 = vpack.c.b16 %v511, %v507
        %v544 = vpack.c.b16 %v512, %v508
        %v545 = vpack.c.b16 %v513, %v509
        %v546 = vpack.c.b16 %v514, %v510
        %579 = vmatpush.bf16.msra.mxu0 %v543
        %580 = vmatpush.bf16.msra.mxu0 %v539
        %581 = vmatpush.bf16.msra.mxu0 %v535
        %582 = vmatpush.bf16.msra.mxu0 %v531
        %583 = vmatpush.bf16.msra.mxu0 %v527
        %584 = vmatpush.bf16.msra.mxu0 %v523
        %585 = vmatpush.bf16.msra.mxu0 %v519
        %586 = vmatpush.bf16.msra.mxu0 %v515
        %587 = vmatmul.bf16.gmra.mxu0 %v411
        %v588 = vpop.f32.mrf.mxu0
        %v589 = vadd.f32 %v387, %v588
        %v590 = vpop.f32.mrf.mxu0
        %v591 = vadd.f32 %v387, %v590
        %592 = vmatmul.bf16.gmra.mxu0 %v412
        %v593 = vpop.f32.mrf.mxu0
        %v594 = vadd.f32 %v387, %v593
        %v595 = vpop.f32.mrf.mxu0
        %v596 = vadd.f32 %v387, %v595
        %597 = vmatmul.bf16.gmra.mxu0 %v413
        %v598 = vpop.f32.mrf.mxu0
        %v599 = vadd.f32 %v387, %v598
        %v600 = vpop.f32.mrf.mxu0
        %v601 = vadd.f32 %v387, %v600
        %602 = vmatmul.bf16.gmra.mxu0 %v414
        %v603 = vpop.f32.mrf.mxu0
        %v604 = vadd.f32 %v387, %v603
        %v605 = vpop.f32.mrf.mxu0
        %v606 = vadd.f32 %v387, %v605
        %607 = vdwg.mxu0
        %608 = vmatpush.bf16.msra.mxu0 %v544
        %609 = vmatpush.bf16.msra.mxu0 %v540
        %610 = vmatpush.bf16.msra.mxu0 %v536
        %611 = vmatpush.bf16.msra.mxu0 %v532
        %612 = vmatpush.bf16.msra.mxu0 %v528
        %613 = vmatpush.bf16.msra.mxu0 %v524
        %614 = vmatpush.bf16.msra.mxu0 %v520
        %615 = vmatpush.bf16.msra.mxu0 %v516
        %616 = vmatmul.bf16.gmra.mxu0 %v411
        %v617 = vpop.f32.mrf.mxu0
        %v618 = vadd.f32 %v388, %v617
        %v619 = vpop.f32.mrf.mxu0
        %v620 = vadd.f32 %v388, %v619
        %621 = vmatmul.bf16.gmra.mxu0 %v412
        %v622 = vpop.f32.mrf.mxu0
        %v623 = vadd.f32 %v388, %v622
        %v624 = vpop.f32.mrf.mxu0
        %v625 = vadd.f32 %v388, %v624
        %626 = vmatmul.bf16.gmra.mxu0 %v413
        %v627 = vpop.f32.mrf.mxu0
        %v628 = vadd.f32 %v388, %v627
        %v629 = vpop.f32.mrf.mxu0
        %v630 = vadd.f32 %v388, %v629
        %631 = vmatmul.bf16.gmra.mxu0 %v414
        %v632 = vpop.f32.mrf.mxu0
        %v633 = vadd.f32 %v388, %v632
        %v634 = vpop.f32.mrf.mxu0
        %v635 = vadd.f32 %v388, %v634
        %636 = vdwg.mxu0
        %637 = vmatpush.bf16.msra.mxu0 %v545
        %638 = vmatpush.bf16.msra.mxu0 %v541
        %639 = vmatpush.bf16.msra.mxu0 %v537
        %640 = vmatpush.bf16.msra.mxu0 %v533
        %641 = vmatpush.bf16.msra.mxu0 %v529
        %642 = vmatpush.bf16.msra.mxu0 %v525
        %643 = vmatpush.bf16.msra.mxu0 %v521
        %644 = vmatpush.bf16.msra.mxu0 %v517
        %645 = vmatmul.bf16.gmra.mxu0 %v411
        %v646 = vpop.f32.mrf.mxu0
        %v647 = vadd.f32 %v389, %v646
        %v648 = vpop.f32.mrf.mxu0
        %v649 = vadd.f32 %v389, %v648
        %650 = vmatmul.bf16.gmra.mxu0 %v412
        %v651 = vpop.f32.mrf.mxu0
        %v652 = vadd.f32 %v389, %v651
        %v653 = vpop.f32.mrf.mxu0
        %v654 = vadd.f32 %v389, %v653
        %655 = vmatmul.bf16.gmra.mxu0 %v413
        %v656 = vpop.f32.mrf.mxu0
        %v657 = vadd.f32 %v389, %v656
        %v658 = vpop.f32.mrf.mxu0
        %v659 = vadd.f32 %v389, %v658
        %660 = vmatmul.bf16.gmra.mxu0 %v414
        %v661 = vpop.f32.mrf.mxu0
        %v662 = vadd.f32 %v389, %v661
        %v663 = vpop.f32.mrf.mxu0
        %v664 = vadd.f32 %v389, %v663
        %665 = vdwg.mxu0
        %666 = vmatpush.bf16.msra.mxu0 %v546
        %667 = vmatpush.bf16.msra.mxu0 %v542
        %668 = vmatpush.bf16.msra.mxu0 %v538
        %669 = vmatpush.bf16.msra.mxu0 %v534
        %670 = vmatpush.bf16.msra.mxu0 %v530
        %671 = vmatpush.bf16.msra.mxu0 %v526
        %672 = vmatpush.bf16.msra.mxu0 %v522
        %673 = vmatpush.bf16.msra.mxu0 %v518
        %674 = vmatmul.bf16.gmra.mxu0 %v411
        %v675 = vpop.f32.mrf.mxu0
        %v676 = vadd.f32 %v390, %v675
        %v677 = vpop.f32.mrf.mxu0
        %v678 = vadd.f32 %v390, %v677
        %679 = vmatmul.bf16.gmra.mxu0 %v412
        %v680 = vpop.f32.mrf.mxu0
        %v681 = vadd.f32 %v390, %v680
        %v682 = vpop.f32.mrf.mxu0
        %v683 = vadd.f32 %v390, %v682
        %684 = vmatmul.bf16.gmra.mxu0 %v413
        %v685 = vpop.f32.mrf.mxu0
        %v686 = vadd.f32 %v390, %v685
        %v687 = vpop.f32.mrf.mxu0
        %v688 = vadd.f32 %v390, %v687
        %689 = vmatmul.bf16.gmra.mxu0 %v414
        %v690 = vpop.f32.mrf.mxu0
        %v691 = vadd.f32 %v390, %v690
        %v692 = vpop.f32.mrf.mxu0
        %v693 = vadd.f32 %v390, %v692
        %694 = vdwg.mxu0
        %v695 = vmax.f32 %v589, 0.0
        %v696 = vmax.f32 %v618, 0.0
        %v697 = vmax.f32 %v647, 0.0
        %v698 = vmax.f32 %v676, 0.0
        %v699 = vmax.f32 %v591, 0.0
        %v700 = vmax.f32 %v620, 0.0
        %v701 = vmax.f32 %v649, 0.0
        %v702 = vmax.f32 %v678, 0.0
        %v703 = vmax.f32 %v594, 0.0
        %v704 = vmax.f32 %v623, 0.0
        %v705 = vmax.f32 %v652, 0.0
        %v706 = vmax.f32 %v681, 0.0
        %v707 = vmax.f32 %v596, 0.0
        %v708 = vmax.f32 %v625, 0.0
        %v709 = vmax.f32 %v654, 0.0
        %v710 = vmax.f32 %v683, 0.0
        %v711 = vmax.f32 %v599, 0.0
        %v712 = vmax.f32 %v628, 0.0
        %v713 = vmax.f32 %v657, 0.0
        %v714 = vmax.f32 %v686, 0.0
        %v715 = vmax.f32 %v601, 0.0
        %v716 = vmax.f32 %v630, 0.0
        %v717 = vmax.f32 %v659, 0.0
        %v718 = vmax.f32 %v688, 0.0
        %v719 = vmax.f32 %v604, 0.0
        %v720 = vmax.f32 %v633, 0.0
        %v721 = vmax.f32 %v662, 0.0
        %v722 = vmax.f32 %v691, 0.0
        %v723 = vmax.f32 %v606, 0.0
        %v724 = vmax.f32 %v635, 0.0
        %v725 = vmax.f32 %v664, 0.0
        %v726 = vmax.f32 %v693, 0.0
        %v727 = vld [vmem:[%s327] sm:$0xff]
        %v728 = vld [vmem:[%s327 + $0x8] sm:$0xff]
        %v729 = vld [vmem:[%s327 + $0x10] sm:$0xff]
        %v730 = vld [vmem:[%s327 + $0x18] sm:$0xff]
        %v731 = vld [vmem:[%s327 + $0x20] sm:$0xff]
        %v732 = vld [vmem:[%s327 + $0x28] sm:$0xff]
        %v733 = vld [vmem:[%s327 + $0x30] sm:$0xff]
        %v734 = vld [vmem:[%s327 + $0x38] sm:$0xff]
        %v735 = vpack.c.bf16 %v699, %v695
        %v736 = vpack.c.bf16 %v700, %v696
        %v737 = vpack.c.bf16 %v701, %v697
        %v738 = vpack.c.bf16 %v702, %v698
        %v739 = vpack.c.bf16 %v707, %v703
        %v740 = vpack.c.bf16 %v708, %v704
        %v741 = vpack.c.bf16 %v709, %v705
        %v742 = vpack.c.bf16 %v710, %v706
        %v743 = vpack.c.bf16 %v715, %v711
        %v744 = vpack.c.bf16 %v716, %v712
        %v745 = vpack.c.bf16 %v717, %v713
        %v746 = vpack.c.bf16 %v718, %v714
        %v747 = vpack.c.bf16 %v723, %v719
        %v748 = vpack.c.bf16 %v724, %v720
        %v749 = vpack.c.bf16 %v725, %v721
        %v750 = vpack.c.bf16 %v726, %v722
        %v751 = vld [vmem:[#allocation8] sm:$0xf]
        %v752 = vld [vmem:[#allocation8 + $0x4] sm:$0xf]
        %v753 = vld [vmem:[#allocation8 + $0x8] sm:$0xf]
        %v754 = vld [vmem:[#allocation8 + $0xc] sm:$0xf]
        %v755 = vld [vmem:[#allocation8 + $0x10] sm:$0xf]
        %v756 = vld [vmem:[#allocation8 + $0x14] sm:$0xf]
        %v757 = vld [vmem:[#allocation8 + $0x18] sm:$0xf]
        %v758 = vld [vmem:[#allocation8 + $0x1c] sm:$0xf]
        %v759 = vld [vmem:[#allocation8 + $0x20] sm:$0xf]
        %v760 = vld [vmem:[#allocation8 + $0x24] sm:$0xf]
        %v761 = vld [vmem:[#allocation8 + $0x28] sm:$0xf]
        %v762 = vld [vmem:[#allocation8 + $0x2c] sm:$0xf]
        %v763 = vld [vmem:[#allocation8 + $0x30] sm:$0xf]
        %v764 = vld [vmem:[#allocation8 + $0x34] sm:$0xf]
        %v765 = vld [vmem:[#allocation8 + $0x38] sm:$0xf]
        %v766 = vld [vmem:[#allocation8 + $0x3c] sm:$0xf]
        %v767 = vld [vmem:[#allocation8 + $0x40] sm:$0xf]
        %v768 = vld [vmem:[#allocation8 + $0x44] sm:$0xf]
        %v769 = vld [vmem:[#allocation8 + $0x48] sm:$0xf]
        %v770 = vld [vmem:[#allocation8 + $0x4c] sm:$0xf]
        %v771 = vld [vmem:[#allocation8 + $0x50] sm:$0xf]
        %v772 = vld [vmem:[#allocation8 + $0x54] sm:$0xf]
        %v773 = vld [vmem:[#allocation8 + $0x58] sm:$0xf]
        %v774 = vld [vmem:[#allocation8 + $0x5c] sm:$0xf]
        %v775 = vld [vmem:[#allocation8 + $0x60] sm:$0xf]
        %v776 = vld [vmem:[#allocation8 + $0x64] sm:$0xf]
        %v777 = vld [vmem:[#allocation8 + $0x68] sm:$0xf]
        %v778 = vld [vmem:[#allocation8 + $0x6c] sm:$0xf]
        %v779 = vld [vmem:[#allocation8 + $0x70] sm:$0xf]
        %v780 = vld [vmem:[#allocation8 + $0x74] sm:$0xf]
        %v781 = vld [vmem:[#allocation8 + $0x78] sm:$0xf]
        %v782 = vld [vmem:[#allocation8 + $0x7c] sm:$0xf]
        %v783 = vld [vmem:[#allocation8 + $0x80] sm:$0xf]
        %v784 = vld [vmem:[#allocation8 + $0x84] sm:$0xf]
        %v785 = vld [vmem:[#allocation8 + $0x88] sm:$0xf]
        %v786 = vld [vmem:[#allocation8 + $0x8c] sm:$0xf]
        %v787 = vld [vmem:[#allocation8 + $0x90] sm:$0xf]
        %v788 = vld [vmem:[#allocation8 + $0x94] sm:$0xf]
        %v789 = vld [vmem:[#allocation8 + $0x98] sm:$0xf]
        %v790 = vld [vmem:[#allocation8 + $0x9c] sm:$0xf]
        %v791 = vld [vmem:[#allocation8 + $0xa0] sm:$0xf]
        %v792 = vld [vmem:[#allocation8 + $0xa4] sm:$0xf]
        %v793 = vld [vmem:[#allocation8 + $0xa8] sm:$0xf]
        %v794 = vld [vmem:[#allocation8 + $0xac] sm:$0xf]
        %v795 = vld [vmem:[#allocation8 + $0xb0] sm:$0xf]
        %v796 = vld [vmem:[#allocation8 + $0xb4] sm:$0xf]
        %v797 = vld [vmem:[#allocation8 + $0xb8] sm:$0xf]
        %v798 = vld [vmem:[#allocation8 + $0xbc] sm:$0xf]
        %v799 = vld [vmem:[#allocation8 + $0xc0] sm:$0xf]
        %v800 = vld [vmem:[#allocation8 + $0xc4] sm:$0xf]
        %v801 = vld [vmem:[#allocation8 + $0xc8] sm:$0xf]
        %v802 = vld [vmem:[#allocation8 + $0xcc] sm:$0xf]
        %v803 = vld [vmem:[#allocation8 + $0xd0] sm:$0xf]
        %v804 = vld [vmem:[#allocation8 + $0xd4] sm:$0xf]
        %v805 = vld [vmem:[#allocation8 + $0xd8] sm:$0xf]
        %v806 = vld [vmem:[#allocation8 + $0xdc] sm:$0xf]
        %v807 = vld [vmem:[#allocation8 + $0xe0] sm:$0xf]
        %v808 = vld [vmem:[#allocation8 + $0xe4] sm:$0xf]
        %v809 = vld [vmem:[#allocation8 + $0xe8] sm:$0xf]
        %v810 = vld [vmem:[#allocation8 + $0xec] sm:$0xf]
        %v811 = vld [vmem:[#allocation8 + $0xf0] sm:$0xf]
        %v812 = vld [vmem:[#allocation8 + $0xf4] sm:$0xf]
        %v813 = vld [vmem:[#allocation8 + $0xf8] sm:$0xf]
        %v814 = vld [vmem:[#allocation8 + $0xfc] sm:$0xf]
        %v879 = vunpack.c.l.b16 %v751
        %v880 = vunpack.c.l.b16 %v752
        %v881 = vunpack.c.l.b16 %v753
        %v882 = vunpack.c.l.b16 %v754
        %v883 = vunpack.c.l.b16 %v755
        %v884 = vunpack.c.l.b16 %v756
        %v885 = vunpack.c.l.b16 %v757
        %v886 = vunpack.c.l.b16 %v758
        %v887 = vunpack.c.l.b16 %v759
        %v888 = vunpack.c.l.b16 %v760
        %v889 = vunpack.c.l.b16 %v761
        %v890 = vunpack.c.l.b16 %v762
        %v891 = vunpack.c.l.b16 %v763
        %v892 = vunpack.c.l.b16 %v764
        %v893 = vunpack.c.l.b16 %v765
        %v894 = vunpack.c.l.b16 %v766
        %v895 = vunpack.c.l.b16 %v767
        %v896 = vunpack.c.l.b16 %v768
        %v897 = vunpack.c.l.b16 %v769
        %v898 = vunpack.c.l.b16 %v770
        %v899 = vunpack.c.l.b16 %v771
        %v900 = vunpack.c.l.b16 %v772
        %v901 = vunpack.c.l.b16 %v773
        %v902 = vunpack.c.l.b16 %v774
        %v903 = vunpack.c.l.b16 %v775
        %v904 = vunpack.c.l.b16 %v776
        %v905 = vunpack.c.l.b16 %v777
        %v906 = vunpack.c.l.b16 %v778
        %v907 = vunpack.c.l.b16 %v779
        %v908 = vunpack.c.l.b16 %v780
        %v909 = vunpack.c.l.b16 %v781
        %v910 = vunpack.c.l.b16 %v782
        %v911 = vunpack.c.l.b16 %v783
        %v912 = vunpack.c.l.b16 %v784
        %v913 = vunpack.c.l.b16 %v785
        %v914 = vunpack.c.l.b16 %v786
        %v915 = vunpack.c.l.b16 %v787
        %v916 = vunpack.c.l.b16 %v788
        %v917 = vunpack.c.l.b16 %v789
        %v918 = vunpack.c.l.b16 %v790
        %v919 = vunpack.c.l.b16 %v791
        %v920 = vunpack.c.l.b16 %v792
        %v921 = vunpack.c.l.b16 %v793
        %v922 = vunpack.c.l.b16 %v794
        %v923 = vunpack.c.l.b16 %v795
        %v924 = vunpack.c.l.b16 %v796
        %v925 = vunpack.c.l.b16 %v797
        %v926 = vunpack.c.l.b16 %v798
        %v927 = vunpack.c.l.b16 %v799
        %v928 = vunpack.c.l.b16 %v800
        %v929 = vunpack.c.l.b16 %v801
        %v930 = vunpack.c.l.b16 %v802
        %v931 = vunpack.c.l.b16 %v803
        %v932 = vunpack.c.l.b16 %v804
        %v933 = vunpack.c.l.b16 %v805
        %v934 = vunpack.c.l.b16 %v806
        %v935 = vunpack.c.l.b16 %v807
        %v936 = vunpack.c.l.b16 %v808
        %v937 = vunpack.c.l.b16 %v809
        %v938 = vunpack.c.l.b16 %v810
        %v939 = vunpack.c.l.b16 %v811
        %v940 = vunpack.c.l.b16 %v812
        %v941 = vunpack.c.l.b16 %v813
        %v942 = vunpack.c.l.b16 %v814
        %v943 = vpack.c.b16 %v880, %v879
        %v944 = vpack.c.b16 %v882, %v881
        %v945 = vpack.c.b16 %v884, %v883
        %v946 = vpack.c.b16 %v886, %v885
        %v947 = vpack.c.b16 %v888, %v887
        %v948 = vpack.c.b16 %v890, %v889
        %v949 = vpack.c.b16 %v892, %v891
        %v950 = vpack.c.b16 %v894, %v893
        %v951 = vpack.c.b16 %v896, %v895
        %v952 = vpack.c.b16 %v898, %v897
        %v953 = vpack.c.b16 %v900, %v899
        %v954 = vpack.c.b16 %v902, %v901
        %v955 = vpack.c.b16 %v904, %v903
        %v956 = vpack.c.b16 %v906, %v905
        %v957 = vpack.c.b16 %v908, %v907
        %v958 = vpack.c.b16 %v910, %v909
        %v959 = vpack.c.b16 %v912, %v911
        %v960 = vpack.c.b16 %v914, %v913
        %v961 = vpack.c.b16 %v916, %v915
        %v962 = vpack.c.b16 %v918, %v917
        %v963 = vpack.c.b16 %v920, %v919
        %v964 = vpack.c.b16 %v922, %v921
        %v965 = vpack.c.b16 %v924, %v923
        %v966 = vpack.c.b16 %v926, %v925
        %v967 = vpack.c.b16 %v928, %v927
        %v968 = vpack.c.b16 %v930, %v929
        %v969 = vpack.c.b16 %v932, %v931
        %v970 = vpack.c.b16 %v934, %v933
        %v971 = vpack.c.b16 %v936, %v935
        %v972 = vpack.c.b16 %v938, %v937
        %v973 = vpack.c.b16 %v940, %v939
        %v974 = vpack.c.b16 %v942, %v941
        %1007 = vmatpush.bf16.msra.mxu0 %v950
        %1008 = vmatpush.bf16.msra.mxu0 %v949
        %1009 = vmatpush.bf16.msra.mxu0 %v948
        %1010 = vmatpush.bf16.msra.mxu0 %v947
        %1011 = vmatpush.bf16.msra.mxu0 %v946
        %1012 = vmatpush.bf16.msra.mxu0 %v945
        %1013 = vmatpush.bf16.msra.mxu0 %v944
        %1014 = vmatpush.bf16.msra.mxu0 %v943
        %1015 = vmatmul.bf16.gmra.mxu0 %v735
        %v1016 = vpop.f32.mrf.mxu0
        %v1017 = vadd.f32 0.0, %v1016
        %v1018 = vpop.f32.mrf.mxu0
        %v1019 = vadd.f32 0.0, %v1018
        %1020 = vmatmul.bf16.gmra.mxu0 %v739
        %v1021 = vpop.f32.mrf.mxu0
        %v1022 = vadd.f32 0.0, %v1021
        %v1023 = vpop.f32.mrf.mxu0
        %v1024 = vadd.f32 0.0, %v1023
        %1025 = vmatmul.bf16.gmra.mxu0 %v743
        %v1026 = vpop.f32.mrf.mxu0
        %v1027 = vadd.f32 0.0, %v1026
        %v1028 = vpop.f32.mrf.mxu0
        %v1029 = vadd.f32 0.0, %v1028
        %1030 = vmatmul.bf16.gmra.mxu0 %v747
        %v1031 = vpop.f32.mrf.mxu0
        %v1032 = vadd.f32 0.0, %v1031
        %v1033 = vpop.f32.mrf.mxu0
        %v1034 = vadd.f32 0.0, %v1033
        %1035 = vdwg.mxu0
        %1036 = vmatpush.bf16.msra.mxu0 %v958
        %1037 = vmatpush.bf16.msra.mxu0 %v957
        %1038 = vmatpush.bf16.msra.mxu0 %v956
        %1039 = vmatpush.bf16.msra.mxu0 %v955
        %1040 = vmatpush.bf16.msra.mxu0 %v954
        %1041 = vmatpush.bf16.msra.mxu0 %v953
        %1042 = vmatpush.bf16.msra.mxu0 %v952
        %1043 = vmatpush.bf16.msra.mxu0 %v951
        %1044 = vmatmul.bf16.gmra.mxu0 %v736
        %v1045 = vpop.f32.mrf.mxu0
        %v1046 = vadd.f32 %v1017, %v1045
        %v1047 = vpop.f32.mrf.mxu0
        %v1048 = vadd.f32 %v1019, %v1047
        %1049 = vmatmul.bf16.gmra.mxu0 %v740
        %v1050 = vpop.f32.mrf.mxu0
        %v1051 = vadd.f32 %v1022, %v1050
        %v1052 = vpop.f32.mrf.mxu0
        %v1053 = vadd.f32 %v1024, %v1052
        %1054 = vmatmul.bf16.gmra.mxu0 %v744
        %v1055 = vpop.f32.mrf.mxu0
        %v1056 = vadd.f32 %v1027, %v1055
        %v1057 = vpop.f32.mrf.mxu0
        %v1058 = vadd.f32 %v1029, %v1057
        %1059 = vmatmul.bf16.gmra.mxu0 %v748
        %v1060 = vpop.f32.mrf.mxu0
        %v1061 = vadd.f32 %v1032, %v1060
        %v1062 = vpop.f32.mrf.mxu0
        %v1063 = vadd.f32 %v1034, %v1062
        %1064 = vdwg.mxu0
        %1065 = vmatpush.bf16.msra.mxu0 %v966
        %1066 = vmatpush.bf16.msra.mxu0 %v965
        %1067 = vmatpush.bf16.msra.mxu0 %v964
        %1068 = vmatpush.bf16.msra.mxu0 %v963
        %1069 = vmatpush.bf16.msra.mxu0 %v962
        %1070 = vmatpush.bf16.msra.mxu0 %v961
        %1071 = vmatpush.bf16.msra.mxu0 %v960
        %1072 = vmatpush.bf16.msra.mxu0 %v959
        %1073 = vmatmul.bf16.gmra.mxu0 %v737
        %v1074 = vpop.f32.mrf.mxu0
        %v1075 = vadd.f32 %v1046, %v1074
        %v1076 = vpop.f32.mrf.mxu0
        %v1077 = vadd.f32 %v1048, %v1076
        %1078 = vmatmul.bf16.gmra.mxu0 %v741
        %v1079 = vpop.f32.mrf.mxu0
        %v1080 = vadd.f32 %v1051, %v1079
        %v1081 = vpop.f32.mrf.mxu0
        %v1082 = vadd.f32 %v1053, %v1081
        %1083 = vmatmul.bf16.gmra.mxu0 %v745
        %v1084 = vpop.f32.mrf.mxu0
        %v1085 = vadd.f32 %v1056, %v1084
        %v1086 = vpop.f32.mrf.mxu0
        %v1087 = vadd.f32 %v1058, %v1086
        %1088 = vmatmul.bf16.gmra.mxu0 %v749
        %v1089 = vpop.f32.mrf.mxu0
        %v1090 = vadd.f32 %v1061, %v1089
        %v1091 = vpop.f32.mrf.mxu0
        %v1092 = vadd.f32 %v1063, %v1091
        %1093 = vdwg.mxu0
        %1094 = vmatpush.bf16.msra.mxu0 %v974
        %1095 = vmatpush.bf16.msra.mxu0 %v973
        %1096 = vmatpush.bf16.msra.mxu0 %v972
        %1097 = vmatpush.bf16.msra.mxu0 %v971
        %1098 = vmatpush.bf16.msra.mxu0 %v970
        %1099 = vmatpush.bf16.msra.mxu0 %v969
        %1100 = vmatpush.bf16.msra.mxu0 %v968
        %1101 = vmatpush.bf16.msra.mxu0 %v967
        %1102 = vmatmul.bf16.gmra.mxu0 %v738
        %v1103 = vpop.f32.mrf.mxu0
        %v1104 = vadd.f32 %v1075, %v1103
        %v1105 = vpop.f32.mrf.mxu0
        %v1106 = vadd.f32 %v1077, %v1105
        %1107 = vmatmul.bf16.gmra.mxu0 %v742
        %v1108 = vpop.f32.mrf.mxu0
        %v1109 = vadd.f32 %v1080, %v1108
        %v1110 = vpop.f32.mrf.mxu0
        %v1111 = vadd.f32 %v1082, %v1110
        %1112 = vmatmul.bf16.gmra.mxu0 %v746
        %v1113 = vpop.f32.mrf.mxu0
        %v1114 = vadd.f32 %v1085, %v1113
        %v1115 = vpop.f32.mrf.mxu0
        %v1116 = vadd.f32 %v1087, %v1115
        %1117 = vmatmul.bf16.gmra.mxu0 %v750
        %v1118 = vpop.f32.mrf.mxu0
        %v1119 = vadd.f32 %v1090, %v1118
        %v1120 = vpop.f32.mrf.mxu0
        %v1121 = vadd.f32 %v1092, %v1120
        %1122 = vdwg.mxu0
        %v1123 = vadd.f32 %v727, %v1104
        %v1124 = vadd.f32 %v728, %v1106
        %v1125 = vadd.f32 %v729, %v1109
        %v1126 = vadd.f32 %v730, %v1111
        %v1127 = vadd.f32 %v731, %v1114
        %v1128 = vadd.f32 %v732, %v1116
        %v1129 = vadd.f32 %v733, %v1119
        %v1130 = vadd.f32 %v734, %v1121
        %1131 = vst [vmem:[%s327] sm:$0xff] %v1123
        %1132 = vst [vmem:[%s327 + $0x8] sm:$0xff] %v1124
        %1133 = vst [vmem:[%s327 + $0x10] sm:$0xff] %v1125
        %1134 = vst [vmem:[%s327 + $0x18] sm:$0xff] %v1126
        %1135 = vst [vmem:[%s327 + $0x20] sm:$0xff] %v1127
        %1136 = vst [vmem:[%s327 + $0x28] sm:$0xff] %v1128
        %1137 = vst [vmem:[%s327 + $0x30] sm:$0xff] %v1129
        %1138 = vst [vmem:[%s327 + $0x38] sm:$0xff] %v1130
        // Predicated region
        $region61: #{tpu_custom_call.1} parent=39 // pred_check
          %p1139 = pneg %p333
        $region62: #{tpu_custom_call.1} parent=39 // pred_check_branch
          %1141 = sbr.rel (%p1139) target = $region64
        $region63: #{tpu_custom_call.1} parent=39 // pred_region
          %v1142 = vld [vmem:[%s327] sm:$0xff]
          %v1143 = vld [vmem:[%s327 + $0x8] sm:$0xff]
          %v1144 = vld [vmem:[%s327 + $0x10] sm:$0xff]
          %v1145 = vld [vmem:[%s327 + $0x18] sm:$0xff]
          %v1146 = vld [vmem:[%s327 + $0x20] sm:$0xff]
          %v1147 = vld [vmem:[%s327 + $0x28] sm:$0xff]
          %v1148 = vld [vmem:[%s327 + $0x30] sm:$0xff]
          %v1149 = vld [vmem:[%s327 + $0x38] sm:$0xff]
          %v1150 = vld [vmem:[%s4] sm:$0x1]
          %v1152 = vperm.slane %v1150, 0
          %v1154 = vadd.f32 %v1142, %v1152
          %v1155 = vadd.f32 %v1143, %v1152
          %v1156 = vadd.f32 %v1144, %v1152
          %v1157 = vadd.f32 %v1145, %v1152
          %v1158 = vadd.f32 %v1146, %v1152
          %v1159 = vadd.f32 %v1147, %v1152
          %v1160 = vadd.f32 %v1148, %v1152
          %v1161 = vadd.f32 %v1149, %v1152
          %1162 = vst [vmem:[%s327] sm:$0xff] %v1154
          %1163 = vst [vmem:[%s327 + $0x8] sm:$0xff] %v1155
          %1164 = vst [vmem:[%s327 + $0x10] sm:$0xff] %v1156
          %1165 = vst [vmem:[%s327 + $0x18] sm:$0xff] %v1157
          %1166 = vst [vmem:[%s327 + $0x20] sm:$0xff] %v1158
          %1167 = vst [vmem:[%s327 + $0x28] sm:$0xff] %v1159
          %1168 = vst [vmem:[%s327 + $0x30] sm:$0xff] %v1160
          %1169 = vst [vmem:[%s327 + $0x38] sm:$0xff] %v1161
        $region64: #{tpu_custom_call.1} parent=39 // pred_fallthru
          _
        %s1170 = sand.u32 %s169, 1
        %s1171 = scalar_lea.sflag [#allocation4], %s1170
        %s1172 = sand.u32 %s169, 1
        %s1173 = smul.addr %s1172, 64
        %s1174 = scalar_lea.vmem [#allocation10], %s1173
        // Predicated region
        $region65: #{tpu_custom_call.1} parent=39 // pred_check
          %p1175 = pneg %p179
        $region66: #{tpu_custom_call.1} parent=39 // pred_check_branch
          %1177 = sbr.rel (%p1175) target = $region68
        $region67: #{tpu_custom_call.1} parent=39 // pred_region
          %s1178 = smul.u32 8, %s28
          %1180 = vsyncadd %s1171, 0
          %s1181 = smul.addr %s1178, 8
          %s1182 = scalar_lea.hbm %s5, %s1181
          %s1183 = sshll.u32 %s1174, 4
          %s1184 = int_to_ptr.vmem [resolvable:$true] %s1183
          %s1185 = sshll.u32 %s1182, 4
          %s1186 = int_to_ptr.hbm [resolvable:$true] %s1185
          %1191 = dma.vmem_to_hbm [thread:$0]  %s1184, 1024, %s1186, %s1171, 128, 128, 8
        $region68: #{tpu_custom_call.1} parent=39 // pred_fallthru
          _
      $region40: #{tpu_custom_call.1} parent=5 // pred_fallthru
        _
      %p1192 = scmp.le.s32.totalorder 2, %s19
      // Predicated region
      $region69: #{tpu_custom_call.1} parent=5 // pred_check
        %p1193 = pneg %p1192
      $region70: #{tpu_custom_call.1} parent=5 // pred_check_branch
        %1195 = sbr.rel (%p1193) target = $region72
      $region71: #{tpu_custom_call.1} parent=5 // pred_region
        %s1196 = ssub.s32 %s19, 2
        // Predicated region
        $region73: #{tpu_custom_call.1} parent=71 // pred_check
          %p1197 = pneg %p185
        $region74: #{tpu_custom_call.1} parent=71 // pred_check_branch
          %1199 = sbr.rel (%p1197) target = $region76
        $region75: #{tpu_custom_call.1} parent=71 // pred_region
          %s1200 = sand.u32 %s170, 1
          %s1201 = scalar_lea.sflag [#allocation4], %s1200
          %s1202 = sand.u32 %s170, 1
          %s1203 = smul.addr %s1202, 64
          %s1204 = scalar_lea.vmem [#allocation10], %s1203
          %1206 = dma.done %s1201, 1024
        $region76: #{tpu_custom_call.1} parent=71 // pred_fallthru
          _
      $region72: #{tpu_custom_call.1} parent=5 // pred_fallthru
        _
    $region6: #{tpu_custom_call.1} parent=1 // loop_footer
      %s23 = sadd.s32 1, %s19
    $region7: #{tpu_custom_call.1} parent=1 // loop_footer_branch
      %18 = sbr.rel target = $region3
    $region8: #{tpu_custom_call.1} parent=1 // loop_exit
      _
    %1207 = vsyncpa [#allocation3], 1
    %s1208 = scalar_lea.sflag [#allocation3], 1
    %1209 = vsyncpa %s1208, 1
    %1210 = vsyncpa [#allocation6], 1
    %1211 = vsyncpa [#allocation9], 1
    %1212 = vsyncpa [#allocation4], 1
    %s1213 = scalar_lea.sflag [#allocation4], 1
    %1214 = vsyncpa %s1213, 1

</llo_original>
